<compile_context>
chip_gen: v5e
topology: v5e:2x2
jax: 0.10.0
libtpu: 0.0.40
codegen_flags: <defaults>
</compile_context>

<pallas_src>
import math
import functools

import jax
import jax.numpy as jnp
from jax.experimental import pallas as pl
from jax.experimental.pallas import tpu as pltpu


# ---------------------------------------------------------------------------
# Kernels — operate on 3D blocks: x/out (tS, B, E), pe (tS, 1, E), mask (tS, B, E)
# ---------------------------------------------------------------------------

def _posenc_kernel_eval(x_ref, pe_ref, o_ref):
    # Single broadcast add; pe (tS,1,E) sublane-broadcasts over B.  pe is read
    # inline (not hoisted) so the compiler can stream it per add.
    o_ref[...] = (x_ref[...] + pe_ref[...]).astype(o_ref.dtype)


def _posenc_kernel_train(x_ref, pe_ref, mask_ref, o_ref, *, keep_scale):
    # Inverted dropout: mask is exactly 0.0 / 1.0 in the activation dtype.
    y = (x_ref[...] + pe_ref[...]) * mask_ref[...]
    o_ref[...] = (y * keep_scale).astype(o_ref.dtype)


# ---------------------------------------------------------------------------
# Buffer construction — mirrors the PyTorch __init__ exactly.
# ---------------------------------------------------------------------------

def make_pos_embedding(emb_size: int, maxlen: int = 5000, dtype=jnp.float32):
    den = jnp.exp(-jnp.arange(0, emb_size, 2, dtype=jnp.float32)
                  * math.log(10000.0) / emb_size)
    pos = jnp.arange(0, maxlen, dtype=jnp.float32).reshape(maxlen, 1)
    pe = jnp.zeros((maxlen, emb_size), dtype=jnp.float32)
    pe = pe.at[:, 0::2].set(jnp.sin(pos * den))
    pe = pe.at[:, 1::2].set(jnp.cos(pos * den))
    return pe.reshape(maxlen, 1, emb_size).astype(dtype)   # (maxlen, 1, E)


# ---------------------------------------------------------------------------
# Tiling / wrapper
# ---------------------------------------------------------------------------

_TARGET_BLOCK_BYTES = 4 * 1024 * 1024   # ~4 MiB tiles amortize per-step overhead
_SMALL_TOTAL_BYTES = 1 * 1024 * 1024    # below this, tiling only adds overhead


def _choose_seq_tile(seq_len, row_bytes, itemsize):
    """Sequence tile: ~_TARGET_BLOCK_BYTES blocks, dtype-aware row multiple."""
    sub = max(8, 32 // max(itemsize, 1))         # 8 (f32), 16 (bf16), 32 (int8)
    total = seq_len * row_bytes
    if total <= _SMALL_TOTAL_BYTES:
        return seq_len                           # tiny input: single block
    tile = max(sub, _TARGET_BLOCK_BYTES // max(row_bytes, 1))
    tile = max(sub, (tile // sub) * sub)
    if tile >= seq_len:
        # Guarantee >= 2 grid steps so both v7x TensorCores get work and the
        # BlockSpec double-buffering has DMA to overlap.
        half = (seq_len + 1) // 2
        tile = max(sub, ((half + sub - 1) // sub) * sub)
        if tile >= seq_len:
            return seq_len                       # too short to split usefully
    return tile


def positional_encoding(token_embedding, pos_embedding, *, dropout_p=0.1,
                        train=False, rng_key=None):
    """out = Dropout(token_embedding + pos_embedding[:S]); eval => identity dropout."""
    S, B, E = token_embedding.shape
    dtype = token_embedding.dtype
    itemsize = jnp.dtype(dtype).itemsize

    # Pre-cast positional rows once to the activation dtype (v5e-friendly).
    pe3d = pos_embedding[:S].astype(dtype)                 # (S, 1, E)

    row_bytes = B * E * itemsize
    t_s = _choose_seq_tile(S, row_bytes, itemsize)
    grid = (pl.cdiv(S, t_s),)                    # masked tail tile when S % t_s != 0

    x_spec = pl.BlockSpec((t_s, B, E), lambda i: (i, 0, 0))
    pe_spec = pl.BlockSpec((t_s, 1, E), lambda i: (i, 0, 0))
    out_shape = jax.ShapeDtypeStruct((S, B, E), dtype)

    use_dropout = train and 0.0 < dropout_p < 1.0
    if train and dropout_p >= 1.0:               # degenerate: everything dropped
        return jnp.zeros_like(token_embedding)

    # VMEM budget: double-buffered x / out (/ mask) blocks + the small pe block.
    block_bytes = t_s * B * E * itemsize
    pe_bytes = t_s * E * itemsize
    n_big = 3 if use_dropout else 2              # x, out (, mask)
    vmem_limit = 2 * (n_big * block_bytes + pe_bytes) + (4 << 20)
    vmem_limit = int(min(max(vmem_limit, 16 << 20), 64 << 20))

    cparams = pltpu.CompilerParams(
        dimension_semantics=("parallel",),       # independent tiles (megacore-friendly)
        vmem_limit_bytes=vmem_limit,
    )
    bytes_accessed = (2 + (1 if use_dropout else 0)) * S * B * E * itemsize \
        + S * E * itemsize
    cost = pl.CostEstimate(flops=2 * S * B * E, transcendentals=0,
                           bytes_accessed=int(bytes_accessed))

    if not use_dropout:
        return pl.pallas_call(
            _posenc_kernel_eval,
            out_shape=out_shape,
            grid=grid,
            in_specs=[x_spec, pe_spec],
            out_specs=x_spec,
            compiler_params=cparams,
            cost_estimate=cost,
        )(token_embedding, pe3d)

    if rng_key is None:
        rng_key = jax.random.PRNGKey(0)
    # Portable keep-mask (0/1 in activation dtype); fused mask+scale stays in kernel.
    keep_mask = jax.random.bernoulli(rng_key, 1.0 - dropout_p, (S, B, E)).astype(dtype)

    return pl.pallas_call(
        functools.partial(_posenc_kernel_train, keep_scale=1.0 / (1.0 - dropout_p)),
        out_shape=out_shape,
        grid=grid,
        in_specs=[x_spec, pe_spec, x_spec],
        out_specs=x_spec,
        compiler_params=cparams,
        cost_estimate=cost,
    )(token_embedding, pe3d, keep_mask)


# ---------------------------------------------------------------------------
# Main
# ---------------------------------------------------------------------------

if __name__ == "__main__":
    S, B, E = 8, 2, 32          # seq=8, batch=2, emb_size=32
    maxlen = 64                 # module default is 5000; small for the demo
    dropout_p = 0.1

    key = jax.random.PRNGKey(0)
    k_x, k_drop = jax.random.split(key)
    token_embedding = jax.random.normal(k_x, (S, B, E), dtype=jnp.float32)
    pos_embedding = make_pos_embedding(E, maxlen=maxlen)

    ref = token_embedding + pos_embedding[:S]          # (S, B, E) broadcast

    # Eval mode: dropout is identity (matches model.eval()).
    out = positional_encoding(token_embedding, pos_embedding,
                              dropout_p=dropout_p, train=False)
    out = jax.block_until_ready(out)
    assert out.shape == (S, B, E)
    assert jnp.allclose(out, ref, atol=1e-6), "eval-mode mismatch vs reference"

    # Train mode: inverted dropout; kept elements must equal ref / (1 - p).
    # TODO(synk): RNG stream cannot bit-match torch.nn.Dropout; only statistics match.
    out_tr = positional_encoding(token_embedding, pos_embedding,
                                 dropout_p=dropout_p, train=True, rng_key=k_drop)
    out_tr = jax.block_until_ready(out_tr)
    scaled = ref * (1.0 / (1.0 - dropout_p))
    kept = out_tr != 0
    assert out_tr.shape == (S, B, E)
    assert jnp.allclose(jnp.where(kept, out_tr, scaled), scaled, atol=1e-5), \
        "train-mode kept values mismatch"

    print("KERNEL_OK")
</pallas_src>

<mosaic_0001>
module attributes {stable_mosaic.version = 11 : i64} {
  func.func @_posenc_kernel_eval(%arg0: i32, %arg1: memref<8x2x32xf32, #tpu.memory_space<vmem>>, %arg2: memref<8x1x32xf32, #tpu.memory_space<vmem>>, %arg3: memref<8x2x32xf32, #tpu.memory_space<vmem>>) attributes {dimension_semantics = [#tpu.dimension_semantics<parallel>], iteration_bounds = array<i64: 1>, scalar_prefetch = 0 : i64, scratch_operands = 0 : i64, tpu.core_type = #tpu.core_type<tc>, window_params = [{transform_indices = @transform_0, window_bounds = array<i64: 8, 2, 32>}, {transform_indices = @transform_1, window_bounds = array<i64: 8, 1, 32>}, {transform_indices = @transform_2, window_bounds = array<i64: 8, 2, 32>}]} {
    %c0 = arith.constant 0 : index
    %c0_0 = arith.constant 0 : index
    %c0_1 = arith.constant 0 : index
    %0 = vector.load %arg1[%c0, %c0_0, %c0_1] : memref<8x2x32xf32, #tpu.memory_space<vmem>>, vector<8x2x32xf32>
    %c0_2 = arith.constant 0 : index
    %c0_3 = arith.constant 0 : index
    %c0_4 = arith.constant 0 : index
    %1 = vector.load %arg2[%c0_2, %c0_3, %c0_4] : memref<8x1x32xf32, #tpu.memory_space<vmem>>, vector<8x1x32xf32>
    %2 = vector.broadcast %1 : vector<8x1x32xf32> to vector<8x2x32xf32>
    %3 = arith.addf %0, %2 : vector<8x2x32xf32>
    %c0_5 = arith.constant 0 : index
    %c0_6 = arith.constant 0 : index
    %c0_7 = arith.constant 0 : index
    %4 = vector.load %arg3[%c0_5, %c0_6, %c0_7] : memref<8x2x32xf32, #tpu.memory_space<vmem>>, vector<8x2x32xf32>
    tpu.vector_store %arg3[%c0_5, %c0_6, %c0_7], %3 {strides = array<i32>} : memref<8x2x32xf32, #tpu.memory_space<vmem>>, vector<8x2x32xf32>,
    return
  }
  func.func @transform_0(%arg0: i32) -> (i32, i32, i32) {
    %c0_i32 = arith.constant 0 : i32
    %c0_i32_0 = arith.constant 0 : i32
    %c0_i32_1 = arith.constant 0 : i32
    return %arg0, %c0_i32, %c0_i32_0 : i32, i32, i32
  }
  func.func @transform_1(%arg0: i32) -> (i32, i32, i32) {
    %c0_i32 = arith.constant 0 : i32
    %c0_i32_0 = arith.constant 0 : i32
    %c0_i32_1 = arith.constant 0 : i32
    return %arg0, %c0_i32, %c0_i32_0 : i32, i32, i32
  }
  func.func @transform_2(%arg0: i32) -> (i32, i32, i32) {
    %c0_i32 = arith.constant 0 : i32
    %c0_i32_0 = arith.constant 0 : i32
    %c0_i32_1 = arith.constant 0 : i32
    return %arg0, %c0_i32, %c0_i32_0 : i32, i32, i32
  }
}

</mosaic_0001>

<llo_original>
// kernel: tpu_custom_call.1
$region0: #{tpu_custom_call.1}
  #allocation0 [shape = 'u32[]', space=smem, size = 0x4, offset = 0x4, fixed_abs, tag = 'smem constant byte address 0x4 - core index']
  #allocation1 [shape = 'u32[72,128]{1,0:T(1,128)}', space=vmem, size = 0x9000, scoped, tag = 'internal scratch']
  %s0 = inlined_call_operand.hbm [shape: f32[8,2,32], index: 0, kind: input, shape index: {}]
  %s1 = inlined_call_operand.hbm [shape: f32[8,1,32], index: 1, kind: input, shape index: {}]
  %s2 = inlined_call_operand.hbm [shape: f32[8,2,32], index: 2, kind: output, shape index: {}]
  %s3 = sld [smem:[#allocation0]]
  $region26: #{tpu_custom_call.1} parent=0
    _
  %s5 = ssub.s32 1, %s3
  %s6 = scalar_select 0, %s5, %s3
  $region1: #{tpu_custom_call.1} parent=0
    #allocation2 [shape = 'u8[8192]{0}', space=vmem, size = 0x2000, scoped, tag = 'input window, operand 0, single buffered']
    #allocation3 [shape = 's32[1]{0}', space=sflag, size = 0x4, scoped, tag = 'scoped memory for tpu_custom_call.1']
    #allocation4 [shape = 's32[1]{0}', space=sflag, size = 0x4, scoped, tag = 'scoped memory for tpu_custom_call.1']
    #allocation5 [shape = 'u8[4096]{0}', space=vmem, size = 0x1000, scoped, tag = 'input window, operand 1, single buffered']
    #allocation6 [shape = 's32[1]{0}', space=sflag, size = 0x4, scoped, tag = 'scoped memory for tpu_custom_call.1']
    #allocation7 [shape = 'u8[8192]{0}', space=vmem, size = 0x2000, scoped, tag = 'output window, operand 0, single buffered']
    %7 = vsyncpa [#allocation3], 0
    %8 = vsyncpa [#allocation6], 0
    %9 = vsyncpa [#allocation4], 0
    // Predicated region
    $region2: #{tpu_custom_call.1} parent=1 // pred_check
      _
    $region3: #{tpu_custom_call.1} parent=1 // pred_check_branch
      %11 = sbr.rel (0) target = $region5
    $region4: #{tpu_custom_call.1} parent=1 // pred_region
      %13 = vsyncadd [#allocation3], 0
      %s14 = sshll.u32 %s0, 4
      %s15 = int_to_ptr.hbm [resolvable:$true] %s14
      %s16 = sshll.u32 [#allocation2], 4
      %s17 = int_to_ptr.vmem [resolvable:$true] %s16
      %22 = dma.hbm_to_vmem [thread:$0]  %s15, 256, %s17, [#allocation3], 32, 32, 2
    $region5: #{tpu_custom_call.1} parent=1 // pred_fallthru
      _
    // Predicated region
    $region6: #{tpu_custom_call.1} parent=1 // pred_check
      _
    $region7: #{tpu_custom_call.1} parent=1 // pred_check_branch
      %24 = sbr.rel (0) target = $region9
    $region8: #{tpu_custom_call.1} parent=1 // pred_region
      %26 = vsyncadd [#allocation6], 0
      %s27 = sshll.u32 %s1, 4
      %s28 = int_to_ptr.hbm [resolvable:$true] %s27
      %s29 = sshll.u32 [#allocation5], 4
      %s30 = int_to_ptr.vmem [resolvable:$true] %s29
      %35 = dma.hbm_to_vmem [thread:$0]  %s28, 128, %s30, [#allocation6], 16, 16, 1
    $region9: #{tpu_custom_call.1} parent=1 // pred_fallthru
      _
    // Predicated region
    $region10: #{tpu_custom_call.1} parent=1 // pred_check
      _
    $region11: #{tpu_custom_call.1} parent=1 // pred_check_branch
      %37 = sbr.rel (0) target = $region13
    $region12: #{tpu_custom_call.1} parent=1 // pred_region
      %39 = dma.done [#allocation3], 256
    $region13: #{tpu_custom_call.1} parent=1 // pred_fallthru
      _
    // Predicated region
    $region14: #{tpu_custom_call.1} parent=1 // pred_check
      _
    $region15: #{tpu_custom_call.1} parent=1 // pred_check_branch
      %41 = sbr.rel (0) target = $region17
    $region16: #{tpu_custom_call.1} parent=1 // pred_region
      %43 = dma.done [#allocation6], 128
    $region17: #{tpu_custom_call.1} parent=1 // pred_fallthru
      _
    %v44 = vld [vmem:[#allocation2] sm:$0x3]
    %v45 = vld [vmem:[#allocation2 + $0x2] sm:$0x3]
    %v46 = vld [vmem:[#allocation2 + $0x4] sm:$0x3]
    %v47 = vld [vmem:[#allocation2 + $0x6] sm:$0x3]
    %v48 = vld [vmem:[#allocation2 + $0x8] sm:$0x3]
    %v49 = vld [vmem:[#allocation2 + $0xa] sm:$0x3]
    %v50 = vld [vmem:[#allocation2 + $0xc] sm:$0x3]
    %v51 = vld [vmem:[#allocation2 + $0xe] sm:$0x3]
    %v52 = vld [vmem:[#allocation5] sm:$0x1]
    %v53 = vld [vmem:[#allocation5 + $0x1] sm:$0x1]
    %v54 = vld [vmem:[#allocation5 + $0x2] sm:$0x1]
    %v55 = vld [vmem:[#allocation5 + $0x3] sm:$0x1]
    %v56 = vld [vmem:[#allocation5 + $0x4] sm:$0x1]
    %v57 = vld [vmem:[#allocation5 + $0x5] sm:$0x1]
    %v58 = vld [vmem:[#allocation5 + $0x6] sm:$0x1]
    %v59 = vld [vmem:[#allocation5 + $0x7] sm:$0x1]
    %v68 = vperm.slane %v52, 0
    %v69 = vperm.slane %v53, 0
    %v70 = vperm.slane %v54, 0
    %v71 = vperm.slane %v55, 0
    %v72 = vperm.slane %v56, 0
    %v73 = vperm.slane %v57, 0
    %v74 = vperm.slane %v58, 0
    %v75 = vperm.slane %v59, 0
    %v84 = vadd.f32 %v44, %v68
    %v85 = vadd.f32 %v45, %v69
    %v86 = vadd.f32 %v46, %v70
    %v87 = vadd.f32 %v47, %v71
    %v88 = vadd.f32 %v48, %v72
    %v89 = vadd.f32 %v49, %v73
    %v90 = vadd.f32 %v50, %v74
    %v91 = vadd.f32 %v51, %v75
    %vm92 = vcmask 254976
    %93 = vst.msk [vmem:[#allocation7] sm:$0x3] %vm92, %v84
    %94 = vst.msk [vmem:[#allocation7 + $0x2] sm:$0x3] %vm92, %v85
    %95 = vst.msk [vmem:[#allocation7 + $0x4] sm:$0x3] %vm92, %v86
    %96 = vst.msk [vmem:[#allocation7 + $0x6] sm:$0x3] %vm92, %v87
    %97 = vst.msk [vmem:[#allocation7 + $0x8] sm:$0x3] %vm92, %v88
    %98 = vst.msk [vmem:[#allocation7 + $0xa] sm:$0x3] %vm92, %v89
    %99 = vst.msk [vmem:[#allocation7 + $0xc] sm:$0x3] %vm92, %v90
    %100 = vst.msk [vmem:[#allocation7 + $0xe] sm:$0x3] %vm92, %v91
    // Predicated region
    $region18: #{tpu_custom_call.1} parent=1 // pred_check
      _
    $region19: #{tpu_custom_call.1} parent=1 // pred_check_branch
      %102 = sbr.rel (0) target = $region21
    $region20: #{tpu_custom_call.1} parent=1 // pred_region
      %104 = vsyncadd [#allocation4], 0
      %s105 = sshll.u32 [#allocation7], 4
      %s106 = int_to_ptr.vmem [resolvable:$true] %s105
      %s107 = sshll.u32 %s2, 4
      %s108 = int_to_ptr.hbm [resolvable:$true] %s107
      %113 = dma.vmem_to_hbm [thread:$0]  %s106, 256, %s108, [#allocation4], 32, 32, 2
    $region21: #{tpu_custom_call.1} parent=1 // pred_fallthru
      _
    // Predicated region
    $region22: #{tpu_custom_call.1} parent=1 // pred_check
      _
    $region23: #{tpu_custom_call.1} parent=1 // pred_check_branch
      %115 = sbr.rel (0) target = $region25
    $region24: #{tpu_custom_call.1} parent=1 // pred_region
      %117 = dma.done [#allocation4], 256
    $region25: #{tpu_custom_call.1} parent=1 // pred_fallthru
      _
    %118 = vsyncpa [#allocation3], 1
    %119 = vsyncpa [#allocation6], 1
    %120 = vsyncpa [#allocation4], 1

</llo_original>
